<compile_context>
chip_gen: v7x
topology: tpu7x:2x2x1
jax: 0.10.0
libtpu: 0.0.40
codegen_flags: <defaults>
</compile_context>

<pallas_src>
import functools

import jax
import jax.numpy as jnp
from jax.experimental import pallas as pl
from jax.experimental.pallas import tpu as pltpu


def _layerbase_kernel(x_ref, w1_ref, b1_ref, w2_ref, b2_ref, w3_ref, b3_ref,
                      out_ref):
    # Hoist all loads once.
    x = x_ref[...]                     # (TILE_B, In)   f32
    w1 = w1_ref[...]                   # (In, H)        bf16
    w2 = w2_ref[...]                   # (H, H)         bf16
    w3 = w3_ref[...]                   # (H, Out)       bf16
    b1 = b1_ref[...]                   # (1, H)         f32
    b2 = b2_ref[...]                   # (1, H)         f32
    b3 = b3_ref[...]                   # (1, Out)       f32

    # Linear 1 + ReLU (bf16 MXU operands, f32 accumulation; the x cast is a
    # cheap VPU op hidden under the matmul).
    h1 = jnp.dot(x.astype(jnp.bfloat16), w1, preferred_element_type=jnp.float32)
    h1 = jnp.maximum(h1 + b1, 0.0)

    # Linear 2 + ReLU
    h2 = jnp.dot(h1.astype(jnp.bfloat16), w2, preferred_element_type=jnp.float32)
    h2 = jnp.maximum(h2 + b2, 0.0)

    # Linear 3
    logits = jnp.dot(h2.astype(jnp.bfloat16), w3, preferred_element_type=jnp.float32)
    logits = logits + b3                                   # (TILE_B, Out)

    # Numerically stable row-wise softmax (exact normalization).
    m = jnp.max(logits, axis=-1, keepdims=True)
    e = jnp.exp(logits - m)
    denom = jnp.sum(e, axis=-1, keepdims=True)
    out_ref[...] = (e / denom).astype(out_ref.dtype)


def _round_up(a, m):
    return (a + m - 1) // m * m


def _choose_tile_b(batch):
    # Multiple of 8 sublanes; cap at 256 so (a) v7x's two TensorCores both get
    # grid steps via dimension_semantics=("parallel",) and (b) the per-step
    # f32 intermediates stay small if hidden_dim grows.  Per-step overhead
    # (~0.35 us) is still well amortized at 256 rows.
    if batch <= 256:
        return max(8, _round_up(batch, 8))
    return 256


@jax.jit
def layerbase_forward(x, params):
    """x: (..., input_dim) float32.

    params: kernel-ready tuple from prepare_params() (bf16 weights, f32
    biases).  Returns softmax probabilities of shape (-1, output_dim).
    """
    w1, b1, w2, b2, w3, b3 = params
    input_dim, hidden_dim = w1.shape
    output_dim = w3.shape[1]

    x2d = x.reshape(-1, input_dim)
    batch = x2d.shape[0]

    tile_b = _choose_tile_b(batch)
    b_pad = _round_up(batch, tile_b)
    if b_pad != batch:
        # Padded rows are zeros -> finite logits -> harmless softmax rows that
        # are sliced off below.
        x2d = jnp.pad(x2d, ((0, b_pad - batch), (0, 0)))
    grid = (b_pad // tile_b,)

    flops = 2 * b_pad * (input_dim * hidden_dim
                         + hidden_dim * hidden_dim
                         + hidden_dim * output_dim)
    transcendentals = b_pad * output_dim                  # exp
    bytes_accessed = (b_pad * input_dim * 4               # x (f32)
                      + 2 * (input_dim * hidden_dim
                             + hidden_dim * hidden_dim
                             + hidden_dim * output_dim)   # weights (bf16)
                      + 4 * (2 * hidden_dim + output_dim) # biases (f32)
                      + b_pad * output_dim * 4)           # output (f32)

    out = pl.pallas_call(
        _layerbase_kernel,
        out_shape=jax.ShapeDtypeStruct((b_pad, output_dim), jnp.float32),
        grid=grid,
        in_specs=[
            pl.BlockSpec((tile_b, input_dim), lambda i: (i, 0)),      # x tile
            pl.BlockSpec((input_dim, hidden_dim), lambda i: (0, 0)),  # w1 (resident)
            pl.BlockSpec((1, hidden_dim), lambda i: (0, 0)),          # b1
            pl.BlockSpec((hidden_dim, hidden_dim), lambda i: (0, 0)), # w2
            pl.BlockSpec((1, hidden_dim), lambda i: (0, 0)),          # b2
            pl.BlockSpec((hidden_dim, output_dim), lambda i: (0, 0)), # w3
            pl.BlockSpec((1, output_dim), lambda i: (0, 0)),          # b3
        ],
        out_specs=pl.BlockSpec((tile_b, output_dim), lambda i: (i, 0)),
        compiler_params=pltpu.CompilerParams(
            dimension_semantics=("parallel",),
            vmem_limit_bytes=32 * 1024 * 1024),
        cost_estimate=pl.CostEstimate(
            flops=flops,
            transcendentals=transcendentals,
            bytes_accessed=bytes_accessed),
    )(x2d, w1, b1, w2, b2, w3, b3)

    # Drop padded batch rows; PyTorch's out.reshape(-1, output_dim) is the
    # identity on this 2-D result.
    return out[:batch]


def _xavier_uniform(key, fan_in, fan_out, dtype=jnp.float32):
    # Matches nn.init.xavier_uniform_ bound: sqrt(6 / (fan_in + fan_out)).
    bound = (6.0 / (fan_in + fan_out)) ** 0.5
    # Stored as (fan_in, fan_out) = transpose of PyTorch's (out, in) weight.
    return jax.random.uniform(key, (fan_in, fan_out), dtype, -bound, bound)


def init_layerbase_params(key, input_dim, output_dim, hidden_dim):
    k1, k2, k3 = jax.random.split(key, 3)
    w1 = _xavier_uniform(k1, input_dim, hidden_dim)
    w2 = _xavier_uniform(k2, hidden_dim, hidden_dim)
    w3 = _xavier_uniform(k3, hidden_dim, output_dim)
    # Biases kept 2-D (1, N) so they live cleanly in VMEM and broadcast.
    b1 = jnp.zeros((1, hidden_dim), jnp.float32)
    b2 = jnp.zeros((1, hidden_dim), jnp.float32)
    b3 = jnp.zeros((1, output_dim), jnp.float32)
    return (w1, b1, w2, b2, w3, b3)


def prepare_params(params):
    """One-time conversion to the kernel-ready layout (bf16 MXU weights)."""
    w1, b1, w2, b2, w3, b3 = params
    return (w1.astype(jnp.bfloat16), b1,
            w2.astype(jnp.bfloat16), b2,
            w3.astype(jnp.bfloat16), b3)


if __name__ == "__main__":
    input_dim, output_dim, hidden_dim = 32, 4, 32
    batch = 8

    key = jax.random.PRNGKey(0)
    kx, kp = jax.random.split(key)
    x = jax.random.normal(kx, (batch, input_dim), jnp.float32)
    params_f32 = init_layerbase_params(kp, input_dim, output_dim, hidden_dim)
    params = prepare_params(params_f32)  # cast weights to bf16 once, up front

    probs = layerbase_forward(x, params)
    probs = jax.block_until_ready(probs)

    # Sanity: shape and softmax rows summing to 1 (exact normalization now).
    assert probs.shape == (batch, output_dim)
    assert jnp.allclose(jnp.sum(probs, axis=1), 1.0, atol=1e-4)

    # Cross-check against a pure-JAX reference of the same math (bf16 matmul
    # operands, f32 accumulation).
    def ref(x, params):
        w1, b1, w2, b2, w3, b3 = params
        h1 = jnp.maximum(
            jnp.dot(x.astype(jnp.bfloat16), w1,
                    preferred_element_type=jnp.float32) + b1, 0.0)
        h2 = jnp.maximum(
            jnp.dot(h1.astype(jnp.bfloat16), w2,
                    preferred_element_type=jnp.float32) + b2, 0.0)
        logits = jnp.dot(h2.astype(jnp.bfloat16), w3,
                         preferred_element_type=jnp.float32) + b3
        return jax.nn.softmax(logits.reshape(-1, w3.shape[1]), axis=1)

    assert jnp.allclose(probs, ref(x, params), atol=1e-3)

    print("KERNEL_OK")
</pallas_src>

<mosaic_0001>
module attributes {stable_mosaic.version = 11 : i64} {
  func.func @_layerbase_kernel(%arg0: i32, %arg1: memref<8x32xf32, #tpu.memory_space<vmem>>, %arg2: memref<32x32xbf16, #tpu.memory_space<vmem>>, %arg3: memref<1x32xf32, #tpu.memory_space<vmem>>, %arg4: memref<32x32xbf16, #tpu.memory_space<vmem>>, %arg5: memref<1x32xf32, #tpu.memory_space<vmem>>, %arg6: memref<32x4xbf16, #tpu.memory_space<vmem>>, %arg7: memref<1x4xf32, #tpu.memory_space<vmem>>, %arg8: memref<8x4xf32, #tpu.memory_space<vmem>>) attributes {dimension_semantics = [#tpu.dimension_semantics<parallel>], iteration_bounds = array<i64: 1>, scalar_prefetch = 0 : i64, scratch_operands = 0 : i64, tpu.core_type = #tpu.core_type<tc>, window_params = [{transform_indices = @transform_0, window_bounds = array<i64: 8, 32>}, {pipeline_mode = #tpu.pipeline_mode<synchronous>, transform_indices = @transform_1, window_bounds = array<i64: 32, 32>}, {pipeline_mode = #tpu.pipeline_mode<synchronous>, transform_indices = @transform_2, window_bounds = array<i64: 1, 32>}, {pipeline_mode = #tpu.pipeline_mode<synchronous>, transform_indices = @transform_3, window_bounds = array<i64: 32, 32>}, {pipeline_mode = #tpu.pipeline_mode<synchronous>, transform_indices = @transform_4, window_bounds = array<i64: 1, 32>}, {pipeline_mode = #tpu.pipeline_mode<synchronous>, transform_indices = @transform_5, window_bounds = array<i64: 32, 4>}, {pipeline_mode = #tpu.pipeline_mode<synchronous>, transform_indices = @transform_6, window_bounds = array<i64: 1, 4>}, {transform_indices = @transform_7, window_bounds = array<i64: 8, 4>}]} {
    %c0 = arith.constant 0 : index
    %c0_0 = arith.constant 0 : index
    %0 = vector.load %arg1[%c0, %c0_0] : memref<8x32xf32, #tpu.memory_space<vmem>>, vector<8x32xf32>
    %c0_1 = arith.constant 0 : index
    %c0_2 = arith.constant 0 : index
    %1 = vector.load %arg2[%c0_1, %c0_2] : memref<32x32xbf16, #tpu.memory_space<vmem>>, vector<32x32xbf16>
    %c0_3 = arith.constant 0 : index
    %c0_4 = arith.constant 0 : index
    %2 = vector.load %arg4[%c0_3, %c0_4] : memref<32x32xbf16, #tpu.memory_space<vmem>>, vector<32x32xbf16>
    %c0_5 = arith.constant 0 : index
    %c0_6 = arith.constant 0 : index
    %3 = vector.load %arg6[%c0_5, %c0_6] : memref<32x4xbf16, #tpu.memory_space<vmem>>, vector<32x4xbf16>
    %c0_7 = arith.constant 0 : index
    %c0_8 = arith.constant 0 : index
    %4 = vector.load %arg3[%c0_7, %c0_8] : memref<1x32xf32, #tpu.memory_space<vmem>>, vector<1x32xf32>
    %c0_9 = arith.constant 0 : index
    %c0_10 = arith.constant 0 : index
    %5 = vector.load %arg5[%c0_9, %c0_10] : memref<1x32xf32, #tpu.memory_space<vmem>>, vector<1x32xf32>
    %c0_11 = arith.constant 0 : index
    %c0_12 = arith.constant 0 : index
    %6 = vector.load %arg7[%c0_11, %c0_12] : memref<1x4xf32, #tpu.memory_space<vmem>>, vector<1x4xf32>
    %7 = arith.truncf %0 : vector<8x32xf32> to vector<8x32xbf16>
    %cst = arith.constant dense<0.000000e+00> : vector<8x32xf32>
    %8 = tpu.matmul %7, %1, %cst {dimension_numbers = #tpu.dot_dimension_numbers<[1], [0], [0], [1], [0, 0, 1, 1], [], []>} : vector<8x32xbf16>, vector<32x32xbf16>, vector<8x32xf32> -> vector<8x32xf32>
    %9 = vector.broadcast %4 : vector<1x32xf32> to vector<8x32xf32>
    %10 = arith.addf %8, %9 : vector<8x32xf32>
    %cst_13 = arith.constant 0.000000e+00 : f32
    %11 = vector.broadcast %cst_13 : f32 to vector<8x32xf32>
    %12 = arith.maximumf %10, %11 : vector<8x32xf32>
    %13 = arith.truncf %12 : vector<8x32xf32> to vector<8x32xbf16>
    %cst_14 = arith.constant dense<0.000000e+00> : vector<8x32xf32>
    %14 = tpu.matmul %13, %2, %cst_14 {dimension_numbers = #tpu.dot_dimension_numbers<[1], [0], [0], [1], [0, 0, 1, 1], [], []>} : vector<8x32xbf16>, vector<32x32xbf16>, vector<8x32xf32> -> vector<8x32xf32>
    %15 = vector.broadcast %5 : vector<1x32xf32> to vector<8x32xf32>
    %16 = arith.addf %14, %15 : vector<8x32xf32>
    %cst_15 = arith.constant 0.000000e+00 : f32
    %17 = vector.broadcast %cst_15 : f32 to vector<8x32xf32>
    %18 = arith.maximumf %16, %17 : vector<8x32xf32>
    %19 = arith.truncf %18 : vector<8x32xf32> to vector<8x32xbf16>
    %cst_16 = arith.constant dense<0.000000e+00> : vector<8x4xf32>
    %20 = tpu.matmul %19, %3, %cst_16 {dimension_numbers = #tpu.dot_dimension_numbers<[1], [0], [0], [1], [0, 0, 1, 1], [], []>} : vector<8x32xbf16>, vector<32x4xbf16>, vector<8x4xf32> -> vector<8x4xf32>
    %21 = vector.broadcast %6 : vector<1x4xf32> to vector<8x4xf32>
    %22 = arith.addf %20, %21 : vector<8x4xf32>
    %cst_17 = arith.constant dense<0xFF800000> : vector<8xf32>
    %23 = vector.multi_reduction <maximumf>, %22, %cst_17 [1] : vector<8x4xf32> to vector<8xf32>
    %24 = vector.shape_cast %23 : vector<8xf32> to vector<8x1xf32>
    %25 = vector.broadcast %24 : vector<8x1xf32> to vector<8x4xf32>
    %26 = arith.subf %22, %25 : vector<8x4xf32>
    %27 = math.exp %26 : vector<8x4xf32>
    %cst_18 = arith.constant dense<0.000000e+00> : vector<8xf32>
    %28 = vector.multi_reduction <add>, %27, %cst_18 [1] : vector<8x4xf32> to vector<8xf32>
    %29 = vector.shape_cast %28 : vector<8xf32> to vector<8x1xf32>
    %30 = vector.broadcast %29 : vector<8x1xf32> to vector<8x4xf32>
    %31 = arith.divf %27, %30 : vector<8x4xf32>
    %c0_19 = arith.constant 0 : index
    %c0_20 = arith.constant 0 : index
    %32 = vector.load %arg8[%c0_19, %c0_20] : memref<8x4xf32, #tpu.memory_space<vmem>>, vector<8x4xf32>
    tpu.vector_store %arg8[%c0_19, %c0_20], %31 {strides = array<i32>} : memref<8x4xf32, #tpu.memory_space<vmem>>, vector<8x4xf32>,
    return
  }
  func.func @transform_0(%arg0: i32) -> (i32, i32) {
    %c0_i32 = arith.constant 0 : i32
    %c0_i32_0 = arith.constant 0 : i32
    return %arg0, %c0_i32 : i32, i32
  }
  func.func @transform_1(%arg0: i32) -> (i32, i32) {
    %c0_i32 = arith.constant 0 : i32
    %c0_i32_0 = arith.constant 0 : i32
    %c0_i32_1 = arith.constant 0 : i32
    return %c0_i32, %c0_i32_0 : i32, i32
  }
  func.func @transform_2(%arg0: i32) -> (i32, i32) {
    %c0_i32 = arith.constant 0 : i32
    %c0_i32_0 = arith.constant 0 : i32
    %c0_i32_1 = arith.constant 0 : i32
    return %c0_i32, %c0_i32_0 : i32, i32
  }
  func.func @transform_3(%arg0: i32) -> (i32, i32) {
    %c0_i32 = arith.constant 0 : i32
    %c0_i32_0 = arith.constant 0 : i32
    %c0_i32_1 = arith.constant 0 : i32
    return %c0_i32, %c0_i32_0 : i32, i32
  }
  func.func @transform_4(%arg0: i32) -> (i32, i32) {
    %c0_i32 = arith.constant 0 : i32
    %c0_i32_0 = arith.constant 0 : i32
    %c0_i32_1 = arith.constant 0 : i32
    return %c0_i32, %c0_i32_0 : i32, i32
  }
  func.func @transform_5(%arg0: i32) -> (i32, i32) {
    %c0_i32 = arith.constant 0 : i32
    %c0_i32_0 = arith.constant 0 : i32
    %c0_i32_1 = arith.constant 0 : i32
    return %c0_i32, %c0_i32_0 : i32, i32
  }
  func.func @transform_6(%arg0: i32) -> (i32, i32) {
    %c0_i32 = arith.constant 0 : i32
    %c0_i32_0 = arith.constant 0 : i32
    %c0_i32_1 = arith.constant 0 : i32
    return %c0_i32, %c0_i32_0 : i32, i32
  }
  func.func @transform_7(%arg0: i32) -> (i32, i32) {
    %c0_i32 = arith.constant 0 : i32
    %c0_i32_0 = arith.constant 0 : i32
    return %arg0, %c0_i32 : i32, i32
  }
}

</mosaic_0001>

<llo_original>
// kernel: layerbase_forward.1
$region0: #{layerbase_forward.1}
  #allocation0 [shape = 'u32[]', space=smem, size = 0x4, offset = 0x4, fixed_abs, tag = 'smem constant byte address 0x4 - core index']
  #allocation1 [shape = 'u32[144,128]{1,0:T(1,128)}', space=vmem, size = 0x12000, scoped, tag = 'internal scratch']
  %s0 = inlined_call_operand.hbm [shape: f32[8,32], index: 0, kind: input, shape index: {}]
  %s1 = inlined_call_operand.vmem [shape: bf16[32,32], index: 1, kind: input, shape index: {}]
  %s2 = inlined_call_operand.vmem [shape: f32[1,32], index: 2, kind: input, shape index: {}]
  %s3 = inlined_call_operand.hbm [shape: bf16[32,32], index: 3, kind: input, shape index: {}]
  %s4 = inlined_call_operand.vmem [shape: f32[1,32], index: 4, kind: input, shape index: {}]
  %s5 = inlined_call_operand.vmem [shape: bf16[32,4], index: 5, kind: input, shape index: {}]
  %s6 = inlined_call_operand.vmem [shape: f32[1,4], index: 6, kind: input, shape index: {}]
  %s7 = inlined_call_operand.vmem [shape: f32[8,4], index: 7, kind: output, shape index: {}]
  %s8 = sld [smem:[#allocation0]]
  $region46: #{layerbase_forward.1} parent=0
    _
  %s10 = ssub.s32 1, %s8
  %s11 = scalar_select 0, %s10, %s8
  $region1: #{layerbase_forward.1} parent=0
    #allocation2 [shape = 'u8[4096]{0}', space=vmem, size = 0x1000, scoped, tag = 'input window, operand 0, single buffered']
    #allocation3 [shape = 's32[1]{0}', space=sflag, size = 0x4, scoped, tag = 'scoped memory for layerbase_forward.1']
    #allocation4 [shape = 'u8[8192]{0}', space=vmem, size = 0x2000, scoped, tag = 'input window, operand 3, single buffered']
    #allocation5 [shape = 's32[1]{0}', space=sflag, size = 0x4, scoped, tag = 'scoped memory for layerbase_forward.1']
    %12 = vsyncpa [#allocation3], 0
    %13 = vsyncpa [#allocation5], 0
    // Predicated region
    $region2: #{layerbase_forward.1} parent=1 // pred_check
      _
    $region3: #{layerbase_forward.1} parent=1 // pred_check_branch
      %15 = sbr.rel (0) target = $region5
    $region4: #{layerbase_forward.1} parent=1 // pred_region
      %s17 = ssub.s32 128, 128
      %18 = vsyncadd [#allocation3], %s17
      %s20 = sshll.u32 [#allocation2], 4
      %s21 = int_to_ptr.vmem [resolvable:$true] %s20
      %23 = dma.hbm_to_vmem [thread:$0]  %s0, 128, %s21, [#allocation3]
    $region5: #{layerbase_forward.1} parent=1 // pred_fallthru
      _
    // Predicated region
    $region6: #{layerbase_forward.1} parent=1 // pred_check
      _
    $region7: #{layerbase_forward.1} parent=1 // pred_check_branch
      %25 = sbr.rel (0) target = $region9
    $region8: #{layerbase_forward.1} parent=1 // pred_region
      _
    $region9: #{layerbase_forward.1} parent=1 // pred_fallthru
      _
    // Predicated region
    $region10: #{layerbase_forward.1} parent=1 // pred_check
      _
    $region11: #{layerbase_forward.1} parent=1 // pred_check_branch
      %27 = sbr.rel (0) target = $region13
    $region12: #{layerbase_forward.1} parent=1 // pred_region
      _
    $region13: #{layerbase_forward.1} parent=1 // pred_fallthru
      _
    // Predicated region
    $region14: #{layerbase_forward.1} parent=1 // pred_check
      _
    $region15: #{layerbase_forward.1} parent=1 // pred_check_branch
      %29 = sbr.rel (0) target = $region17
    $region16: #{layerbase_forward.1} parent=1 // pred_region
      %s31 = ssub.s32 256, 256
      %32 = vsyncadd [#allocation5], %s31
      %s33 = sshll.u32 [#allocation4], 4
      %s34 = int_to_ptr.vmem [resolvable:$true] %s33
      %39 = dma.hbm_to_vmem [thread:$0]  %s3, 256, %s34, [#allocation5], 64, 64, 4
    $region17: #{layerbase_forward.1} parent=1 // pred_fallthru
      _
    // Predicated region
    $region18: #{layerbase_forward.1} parent=1 // pred_check
      _
    $region19: #{layerbase_forward.1} parent=1 // pred_check_branch
      %41 = sbr.rel (0) target = $region21
    $region20: #{layerbase_forward.1} parent=1 // pred_region
      _
    $region21: #{layerbase_forward.1} parent=1 // pred_fallthru
      _
    // Predicated region
    $region22: #{layerbase_forward.1} parent=1 // pred_check
      _
    $region23: #{layerbase_forward.1} parent=1 // pred_check_branch
      %43 = sbr.rel (0) target = $region25
    $region24: #{layerbase_forward.1} parent=1 // pred_region
      _
    $region25: #{layerbase_forward.1} parent=1 // pred_fallthru
      _
    // Predicated region
    $region26: #{layerbase_forward.1} parent=1 // pred_check
      _
    $region27: #{layerbase_forward.1} parent=1 // pred_check_branch
      %45 = sbr.rel (0) target = $region29
    $region28: #{layerbase_forward.1} parent=1 // pred_region
      _
    $region29: #{layerbase_forward.1} parent=1 // pred_fallthru
      _
    // Predicated region
    $region30: #{layerbase_forward.1} parent=1 // pred_check
      _
    $region31: #{layerbase_forward.1} parent=1 // pred_check_branch
      %47 = sbr.rel (0) target = $region33
    $region32: #{layerbase_forward.1} parent=1 // pred_region
      %48 = dma.done [#allocation3], 128
    $region33: #{layerbase_forward.1} parent=1 // pred_fallthru
      _
    // Predicated region
    $region34: #{layerbase_forward.1} parent=1 // pred_check
      _
    $region35: #{layerbase_forward.1} parent=1 // pred_check_branch
      %50 = sbr.rel (0) target = $region37
    $region36: #{layerbase_forward.1} parent=1 // pred_region
      %51 = dma.done [#allocation5], 256
    $region37: #{layerbase_forward.1} parent=1 // pred_fallthru
      _
    %v53 = vld [vmem:[#allocation2] sm:$0xff]
    %v54 = vld [vmem:[%s1] sm:$0xf]
    %v55 = vld [vmem:[%s1 + $0x4] sm:$0xf]
    %v56 = vld [vmem:[%s1 + $0x8] sm:$0xf]
    %v57 = vld [vmem:[%s1 + $0xc] sm:$0xf]
    %v58 = vld [vmem:[#allocation4] sm:$0xf]
    %v59 = vld [vmem:[#allocation4 + $0x4] sm:$0xf]
    %v60 = vld [vmem:[#allocation4 + $0x8] sm:$0xf]
    %v61 = vld [vmem:[#allocation4 + $0xc] sm:$0xf]
    %v62 = vld [vmem:[%s5] sm:$0xf]
    %v63 = vld [vmem:[%s5 + $0x4] sm:$0xf]
    %v64 = vld [vmem:[%s5 + $0x8] sm:$0xf]
    %v65 = vld [vmem:[%s5 + $0xc] sm:$0xf]
    %v66 = vld [vmem:[%s2] sm:$0x1]
    %v67 = vld [vmem:[%s4] sm:$0x1]
    %v68 = vld [vmem:[%s6] sm:$0x1]
    %v69 = vpack.c.bf16 %v53, %v53
    %v71 = vlaneseq
    %v72 = vshrl.u32 %v71, 7
    %v73 = vsub.s32 0, %v72
    %v74 = vrot.slane %v66, %v73
    %v80 = vunpack.c.l.b16 %v54
    %v81 = vunpack.c.l.b16 %v55
    %v82 = vunpack.c.l.b16 %v56
    %v83 = vunpack.c.l.b16 %v57
    %v84 = vpack.c.b16 %v81, %v80
    %v85 = vpack.c.b16 %v83, %v82
    %vm88 = vcmask 261120
    %v90 = vsel %vm88, %v69, 0
    %92 = vmatprep.subr.bf16.mxu0 0
    %93 = vmatpush1.bf16.msra.mxu0 %v84
    %94 = vmatprep.subr.bf16.mxu0 0
    %95 = vmatpush1.bf16.msra.mxu0 %v85
    %96 = vmatprep.subr.bf16.mxu0 0
    %97 = vmatpush1.bf16.msra.mxu0 0
    %98 = vmatprep.subr.bf16.mxu0 0
    %99 = vmatpush1.bf16.msra.mxu0 0
    %100 = vmatprep.subr.bf16.mxu0 0
    %101 = vmatpush1.bf16.msra.mxu0 0
    %102 = vmatprep.subr.bf16.mxu0 0
    %103 = vmatpush1.bf16.msra.mxu0 0
    %104 = vmatprep.subr.bf16.mxu0 0
    %105 = vmatpush1.bf16.msra.mxu0 0
    %106 = vmatprep.subr.bf16.mxu0 0
    %107 = vmatpush1.bf16.msra.mxu0 0
    %108 = vmatprep.subr.bf16.mxu0 0
    %109 = vmatpush1.bf16.msra.mxu0 0
    %110 = vmatprep.subr.bf16.mxu0 0
    %111 = vmatpush1.bf16.msra.mxu0 0
    %112 = vmatprep.subr.bf16.mxu0 0
    %113 = vmatpush1.bf16.msra.mxu0 0
    %114 = vmatprep.subr.bf16.mxu0 0
    %115 = vmatpush1.bf16.msra.mxu0 0
    %116 = vmatprep.subr.bf16.mxu0 0
    %117 = vmatpush1.bf16.msra.mxu0 0
    %118 = vmatprep.subr.bf16.mxu0 0
    %119 = vmatpush1.bf16.msra.mxu0 0
    %120 = vmatprep.subr.bf16.mxu0 0
    %121 = vmatpush1.bf16.msra.mxu0 0
    %122 = vmatprep.subr.bf16.mxu0 0
    %123 = vmatpush1.bf16.msra.mxu0 0
    %124 = vmatprep.mubr.bf16.mxu0 0
    %125 = vmatmul.mubr.bf16.gmra.mrb[0].mxu0 %v90
    %v126 = vpop.f32.mrb[0].mxu0
    %v127 = vadd.f32 %v74, %v126
    %v128 = vpop.f32.mrb[0].mxu0
    %v129 = vpop.f32.mrb[0].mxu0
    %v130 = vpop.f32.mrb[0].mxu0
    %131 = vdwg.mxu0
    %v132 = vmax.f32 %v127, 0.0
    %v133 = vpack.c.bf16 %v132, %v132
    %v135 = vlaneseq
    %v136 = vshrl.u32 %v135, 7
    %v137 = vsub.s32 0, %v136
    %v138 = vrot.slane %v67, %v137
    %v144 = vunpack.c.l.b16 %v58
    %v145 = vunpack.c.l.b16 %v59
    %v146 = vunpack.c.l.b16 %v60
    %v147 = vunpack.c.l.b16 %v61
    %v148 = vpack.c.b16 %v145, %v144
    %v149 = vpack.c.b16 %v147, %v146
    %v153 = vsel %vm88, %v133, 0
    %155 = vmatprep.subr.bf16.mxu0 0
    %156 = vmatpush1.bf16.msra.mxu0 %v148
    %157 = vmatprep.subr.bf16.mxu0 0
    %158 = vmatpush1.bf16.msra.mxu0 %v149
    %159 = vmatprep.subr.bf16.mxu0 0
    %160 = vmatpush1.bf16.msra.mxu0 0
    %161 = vmatprep.subr.bf16.mxu0 0
    %162 = vmatpush1.bf16.msra.mxu0 0
    %163 = vmatprep.subr.bf16.mxu0 0
    %164 = vmatpush1.bf16.msra.mxu0 0
    %165 = vmatprep.subr.bf16.mxu0 0
    %166 = vmatpush1.bf16.msra.mxu0 0
    %167 = vmatprep.subr.bf16.mxu0 0
    %168 = vmatpush1.bf16.msra.mxu0 0
    %169 = vmatprep.subr.bf16.mxu0 0
    %170 = vmatpush1.bf16.msra.mxu0 0
    %171 = vmatprep.subr.bf16.mxu0 0
    %172 = vmatpush1.bf16.msra.mxu0 0
    %173 = vmatprep.subr.bf16.mxu0 0
    %174 = vmatpush1.bf16.msra.mxu0 0
    %175 = vmatprep.subr.bf16.mxu0 0
    %176 = vmatpush1.bf16.msra.mxu0 0
    %177 = vmatprep.subr.bf16.mxu0 0
    %178 = vmatpush1.bf16.msra.mxu0 0
    %179 = vmatprep.subr.bf16.mxu0 0
    %180 = vmatpush1.bf16.msra.mxu0 0
    %181 = vmatprep.subr.bf16.mxu0 0
    %182 = vmatpush1.bf16.msra.mxu0 0
    %183 = vmatprep.subr.bf16.mxu0 0
    %184 = vmatpush1.bf16.msra.mxu0 0
    %185 = vmatprep.subr.bf16.mxu0 0
    %186 = vmatpush1.bf16.msra.mxu0 0
    %187 = vmatprep.mubr.bf16.mxu0 0
    %188 = vmatmul.mubr.bf16.gmra.mrb[0].mxu0 %v153
    %v189 = vpop.f32.mrb[0].mxu0
    %v190 = vadd.f32 %v138, %v189
    %v191 = vpop.f32.mrb[0].mxu0
    %v192 = vpop.f32.mrb[0].mxu0
    %v193 = vpop.f32.mrb[0].mxu0
    %194 = vdwg.mxu0
    %v195 = vmax.f32 %v190, 0.0
    %v196 = vpack.c.bf16 %v195, %v195
    %v198 = vlaneseq
    %v199 = vshrl.u32 %v198, 7
    %v200 = vsub.s32 0, %v199
    %v201 = vrot.slane %v68, %v200
    %v207 = vunpack.c.l.b16 %v62
    %v208 = vunpack.c.l.b16 %v63
    %v209 = vunpack.c.l.b16 %v64
    %v210 = vunpack.c.l.b16 %v65
    %v211 = vpack.c.b16 %v208, %v207
    %v212 = vpack.c.b16 %v210, %v209
    %v216 = vsel %vm88, %v196, 0
    %218 = vmatprep.subr.bf16.mxu0 0
    %219 = vmatpush1.bf16.msra.mxu0 %v211
    %220 = vmatprep.subr.bf16.mxu0 0
    %221 = vmatpush1.bf16.msra.mxu0 %v212
    %222 = vmatprep.subr.bf16.mxu0 0
    %223 = vmatpush1.bf16.msra.mxu0 0
    %224 = vmatprep.subr.bf16.mxu0 0
    %225 = vmatpush1.bf16.msra.mxu0 0
    %226 = vmatprep.subr.bf16.mxu0 0
    %227 = vmatpush1.bf16.msra.mxu0 0
    %228 = vmatprep.subr.bf16.mxu0 0
    %229 = vmatpush1.bf16.msra.mxu0 0
    %230 = vmatprep.subr.bf16.mxu0 0
    %231 = vmatpush1.bf16.msra.mxu0 0
    %232 = vmatprep.subr.bf16.mxu0 0
    %233 = vmatpush1.bf16.msra.mxu0 0
    %234 = vmatprep.subr.bf16.mxu0 0
    %235 = vmatpush1.bf16.msra.mxu0 0
    %236 = vmatprep.subr.bf16.mxu0 0
    %237 = vmatpush1.bf16.msra.mxu0 0
    %238 = vmatprep.subr.bf16.mxu0 0
    %239 = vmatpush1.bf16.msra.mxu0 0
    %240 = vmatprep.subr.bf16.mxu0 0
    %241 = vmatpush1.bf16.msra.mxu0 0
    %242 = vmatprep.subr.bf16.mxu0 0
    %243 = vmatpush1.bf16.msra.mxu0 0
    %244 = vmatprep.subr.bf16.mxu0 0
    %245 = vmatpush1.bf16.msra.mxu0 0
    %246 = vmatprep.subr.bf16.mxu0 0
    %247 = vmatpush1.bf16.msra.mxu0 0
    %248 = vmatprep.subr.bf16.mxu0 0
    %249 = vmatpush1.bf16.msra.mxu0 0
    %250 = vmatprep.mubr.bf16.mxu0 0
    %251 = vmatmul.mubr.bf16.gmra.mrb[0].mxu0 %v216
    %v252 = vpop.f32.mrb[0].mxu0
    %v253 = vadd.f32 %v201, %v252
    %v254 = vpop.f32.mrb[0].mxu0
    %v255 = vpop.f32.mrb[0].mxu0
    %v256 = vpop.f32.mrb[0].mxu0
    %257 = vdwg.mxu0
    %vm258 = vcmask 31744
    %v259 = vsel %vm258, %v253, -inf
    %260 = vmax.xlane.f32.xlu0 %v259
    %v261 = vpop.xlane.xlu0 %260
    %v262 = vsub.f32 %v253, %v261
    %v263 = vmul.f32 %v262, 1.442695
    %v264 = vpow.pop %v263
    %v265 = vsel %vm258, %v264, 0.0
    %266 = vadd.xlane.f32.xlu0 %v265
    %v267 = vpop.xlane.xlu0 %266
    %v268 = vrcp.pop %v267
    %v269 = vmul.f32 %v264, %v268
    %270 = vst.msk [vmem:[%s7] sm:$0xff] %vm258, %v269
    // Predicated region
    $region38: #{layerbase_forward.1} parent=1 // pred_check
      _
    $region39: #{layerbase_forward.1} parent=1 // pred_check_branch
      %272 = sbr.rel (0) target = $region41
    $region40: #{layerbase_forward.1} parent=1 // pred_region
      _
    $region41: #{layerbase_forward.1} parent=1 // pred_fallthru
      _
    // Predicated region
    $region42: #{layerbase_forward.1} parent=1 // pred_check
      _
    $region43: #{layerbase_forward.1} parent=1 // pred_check_branch
      %274 = sbr.rel (0) target = $region45
    $region44: #{layerbase_forward.1} parent=1 // pred_region
      _
    $region45: #{layerbase_forward.1} parent=1 // pred_fallthru
      _
    %275 = vsyncpa [#allocation3], 1
    %276 = vsyncpa [#allocation5], 1

</llo_original>
